<compile_context>
chip_gen: v7x
topology: tpu7x:2x2x1
jax: 0.10.0
libtpu: 0.0.40
codegen_flags: <defaults>
</compile_context>

<pallas_src>
import functools

import jax
import jax.numpy as jnp
from jax.experimental import pallas as pl
from jax.experimental.pallas import tpu as pltpu

_LANE = 128
_SUBLANE = 8


def _round_up(x, m):
    return (x + m - 1) // m * m


def _cdiv(a, b):
    return -(-a // b)


def _query_vmem_capacity():
    try:
        return int(pltpu.get_tpu_info().vmem_capacity_bytes)
    except Exception:
        return 64 * 1024 * 1024   # conservative fallback (v7x per-TC VMEM)


_VMEM_CAP = _query_vmem_capacity()


def _pick_tile_rows(batch, g, d, logit_isize, hid_isize):
    """Batch-tile rows: VMEM-budgeted, padding-aware/balanced, >=2 tiles for megacore."""
    sub = 16 if min(logit_isize, hid_isize) < 4 else 8
    budget = _VMEM_CAP * 3 // 8                    # ~24 MiB on 64 MiB v7x, ~48 MiB on v5e/v6e
    row_cap = 512 if _VMEM_CAP <= (64 << 20) else 1024
    row_bytes = 2 * g * logit_isize + 2 * d * hid_isize   # pred+labels + q+t per row
    tb = max((budget // (2 * row_bytes)) // sub * sub, sub)
    tb = min(tb, row_cap)
    if batch >= 2 * sub:
        # keep >=2 grid steps so ("parallel",) can use both v7x TensorCores
        tb = min(tb, _round_up(_cdiv(batch, 2), sub))
    if tb >= batch:
        return batch, 1                            # single full-batch tile (full-dim block)
    num_tiles = _cdiv(batch, tb)
    tb = _round_up(_cdiv(batch, num_tiles), sub)   # balance tiles -> no near-empty tail
    return tb, _cdiv(batch, tb)


def _partial_loss_kernel(pred_ref, labels_ref, q_ref, t_ref, out_ref, *,
                         batch, tile_rows):
    # pred/labels: (TB, G)   q/t: (TB, D)   out: (1, 8, 128) f32 partial sums
    needs_mask = (batch % tile_rows) != 0          # static Python bool
    if needs_mask:
        rows_left = batch - pl.program_id(0) * tile_rows
        row_idx = jax.lax.broadcasted_iota(jnp.int32, (tile_rows, 1), 0)
        row_valid = row_idx < rows_left

    # Inputs keep their HBM dtype through the DMA (bf16 tiles halve traffic);
    # cast to f32 in-register for the accumulations.
    pred = pred_ref[...].astype(jnp.float32)
    labels = labels_ref[...].astype(jnp.float32)
    if needs_mask:                                 # mask BEFORE max/exp: garbage rows -> 0
        pred = jnp.where(row_valid, pred, 0.0)
        labels = jnp.where(row_valid, labels, 0.0)

    # --- MSE partial: sum of squared differences over valid rows ---
    diff = pred - labels
    sq_sum = jnp.sum(diff * diff)

    # --- listwise softmax CE partial: sum_b (lse_b - pred[b, 0]) ---
    m = jnp.max(pred, axis=-1, keepdims=True)
    lse = jnp.log(jnp.sum(jnp.exp(pred - m), axis=-1, keepdims=True)) + m
    ce_row = lse - pred[:, 0:1]
    if needs_mask:
        ce_row = jnp.where(row_valid, ce_row, 0.0)
    ce_sum = jnp.sum(ce_row)

    # --- cosine partial: sum_b cos(q_b, t_b) (masked rows contribute exactly 0) ---
    q = q_ref[...].astype(jnp.float32)
    t = t_ref[...].astype(jnp.float32)
    if needs_mask:
        q = jnp.where(row_valid, q, 0.0)
        t = jnp.where(row_valid, t, 0.0)
    q_inv = jax.lax.rsqrt(jnp.sum(q * q, axis=-1, keepdims=True) + 1e-12)
    t_inv = jax.lax.rsqrt(jnp.sum(t * t, axis=-1, keepdims=True) + 1e-12)
    cos_sum = jnp.sum((q * q_inv) * (t * t_inv))

    # lane-dense store of the three scalar partials (lanes 0..2 of sublane 0)
    lane = jax.lax.broadcasted_iota(jnp.int32, out_ref.shape, 2)
    sub = jax.lax.broadcasted_iota(jnp.int32, out_ref.shape, 1)
    row0 = sub == 0
    out_ref[...] = (jnp.where(row0 & (lane == 0), sq_sum, 0.0)
                    + jnp.where(row0 & (lane == 1), ce_sum, 0.0)
                    + jnp.where(row0 & (lane == 2), cos_sum, 0.0))


@functools.partial(jax.jit, static_argnames=("tile_rows",))
def _compound_forward(pred, labels, q_hidden, t_hidden, alphas, tile_rows=None):
    B, G = pred.shape
    D = q_hidden.shape[1]
    l_isize = jnp.dtype(pred.dtype).itemsize
    h_isize = jnp.dtype(q_hidden.dtype).itemsize

    if tile_rows is None:
        TB, num_tiles = _pick_tile_rows(B, G, D, l_isize, h_isize)
    else:
        TB = B if int(tile_rows) >= B else int(tile_rows)
        num_tiles = _cdiv(B, TB)

    # Honest VMEM limit: ~2.5x the double-buffered per-step tile footprint + headroom,
    # capped at 75% of physical VMEM (never claim the whole thing on v7x).
    tile_bytes = TB * (2 * G * l_isize + 2 * D * h_isize)
    vmem_limit = max(32 << 20, int(2.5 * 2 * tile_bytes) + (4 << 20))
    vmem_limit = min(vmem_limit, _VMEM_CAP * 3 // 4)

    kernel = functools.partial(_partial_loss_kernel, batch=B, tile_rows=TB)

    cost = pl.CostEstimate(
        flops=int(B * (8 * G + 10 * D)),
        transcendentals=int(B * G + 2 * B),
        bytes_accessed=int(2 * B * G * l_isize + 2 * B * D * h_isize
                           + num_tiles * _SUBLANE * _LANE * 4),
    )

    partials = pl.pallas_call(
        kernel,
        out_shape=jax.ShapeDtypeStruct((num_tiles, _SUBLANE, _LANE), jnp.float32),
        grid=(num_tiles,),
        in_specs=[
            pl.BlockSpec((TB, G), lambda i: (i, 0)),
            pl.BlockSpec((TB, G), lambda i: (i, 0)),
            pl.BlockSpec((TB, D), lambda i: (i, 0)),
            pl.BlockSpec((TB, D), lambda i: (i, 0)),
        ],
        out_specs=pl.BlockSpec((1, _SUBLANE, _LANE), lambda i: (i, 0, 0)),
        compiler_params=pltpu.CompilerParams(
            dimension_semantics=("parallel",),
            vmem_limit_bytes=vmem_limit,
        ),
        cost_estimate=cost,
    )(pred, labels, q_hidden, t_hidden)

    sums = jnp.sum(partials, axis=(0, 1))          # (128,), lanes 0..2 hold the partials
    mse = sums[0] / (B * G)
    ce = sums[1] / B
    cos_loss = 1.0 - sums[2] / B
    loss_vals = jnp.stack([mse, ce, cos_loss])
    total = jnp.dot(loss_vals, alphas.astype(jnp.float32))
    return total, loss_vals


class CompoundLossJAX:
    """JAX/Pallas port of CompoundLoss: weighted sum of sub-losses + log dict."""

    _names = ("mse", "softmax", "cosine")

    def __init__(self, alphas=None, tile_rows=None):
        n = len(self._names)
        self.alphas = jnp.asarray(alphas if alphas is not None else [1.0] * n,
                                  dtype=jnp.float32)
        if tile_rows is not None and (tile_rows <= 0 or tile_rows % 8 != 0):
            raise ValueError("tile_rows must be a positive multiple of 8 "
                             "(16 for sub-32-bit input dtypes)")
        self.tile_rows = tile_rows   # optional override

    def __call__(self, pred, labels=None, query_hidden_states=None,
                 text_hidden_states=None, **kwargs):
        total, loss_vals = _compound_forward(pred, labels, query_hidden_states,
                                             text_hidden_states, self.alphas,
                                             tile_rows=self.tile_rows)
        # ONE device->host transfer for logging (mirrors .detach().cpu().item()).
        vals = jax.device_get(loss_vals)
        to_log = {name: float(v) for name, v in zip(self._names, vals)}
        return total, to_log


def _reference(pred, labels, q, t, alphas):
    """Pure-JAX reference for correctness checking (all math in f32)."""
    pred = pred.astype(jnp.float32)
    labels = labels.astype(jnp.float32)
    q = q.astype(jnp.float32)
    t = t.astype(jnp.float32)
    mse = jnp.mean((pred - labels) ** 2)
    ls = jax.nn.log_softmax(pred, axis=-1)
    ce = -jnp.mean(ls[:, 0])
    qn = q / jnp.sqrt(jnp.sum(q * q, axis=-1, keepdims=True) + 1e-12)
    tn = t / jnp.sqrt(jnp.sum(t * t, axis=-1, keepdims=True) + 1e-12)
    cos_loss = jnp.mean(1.0 - jnp.sum(qn * tn, axis=-1))
    return alphas[0] * mse + alphas[1] * ce + alphas[2] * cos_loss


if __name__ == "__main__":
    key = jax.random.PRNGKey(0)
    alphas = [1.0, 0.5, 2.0]

    # --- test 1: small shapes, single tile, no masking ---
    k1, k2, k3, k4 = jax.random.split(key, 4)
    B, G, D = 8, 16, 32
    pred = jax.random.normal(k1, (B, G), dtype=jnp.float32)
    labels = jax.random.normal(k2, (B, G), dtype=jnp.float32)
    qh = jax.random.normal(k3, (B, D), dtype=jnp.float32)
    th = jax.random.normal(k4, (B, D), dtype=jnp.float32)

    compound = CompoundLossJAX(alphas=alphas)
    total, to_log = compound(pred, labels=labels, query_hidden_states=qh,
                             text_hidden_states=th)
    total = jax.block_until_ready(total)
    ref = jax.block_until_ready(_reference(pred, labels, qh, th, alphas))
    assert abs(float(total) - float(ref)) < 1e-4, (float(total), float(ref))
    assert set(to_log.keys()) == {"mse", "softmax", "cosine"}

    # --- test 2: multiple tiles + partial trailing tile (in-kernel row masking) ---
    k5, k6, k7, k8 = jax.random.split(jax.random.PRNGKey(1), 4)
    B2, G2, D2 = 20, 16, 32
    pred2 = jax.random.normal(k5, (B2, G2), dtype=jnp.float32)
    labels2 = jax.random.normal(k6, (B2, G2), dtype=jnp.float32)
    qh2 = jax.random.normal(k7, (B2, D2), dtype=jnp.float32)
    th2 = jax.random.normal(k8, (B2, D2), dtype=jnp.float32)

    compound_tiled = CompoundLossJAX(alphas=alphas, tile_rows=8)   # 3 tiles, 4 masked rows
    total2, to_log2 = compound_tiled(pred2, labels=labels2,
                                     query_hidden_states=qh2,
                                     text_hidden_states=th2)
    total2 = jax.block_until_ready(total2)
    ref2 = jax.block_until_ready(_reference(pred2, labels2, qh2, th2, alphas))
    assert abs(float(total2) - float(ref2)) < 1e-4, (float(total2), float(ref2))
    assert set(to_log2.keys()) == {"mse", "softmax", "cosine"}

    # --- test 3: bf16 inputs stay bf16 through the DMA (f32 math in-register) ---
    k9, k10, k11, k12 = jax.random.split(jax.random.PRNGKey(2), 4)
    B3, G3, D3 = 32, 16, 32
    pred3 = jax.random.normal(k9, (B3, G3), dtype=jnp.bfloat16)
    labels3 = jax.random.normal(k10, (B3, G3), dtype=jnp.bfloat16)
    qh3 = jax.random.normal(k11, (B3, D3), dtype=jnp.bfloat16)
    th3 = jax.random.normal(k12, (B3, D3), dtype=jnp.bfloat16)

    compound_bf16 = CompoundLossJAX(alphas=alphas)    # auto tiling -> 2 tiles of 16 rows
    total3, to_log3 = compound_bf16(pred3, labels=labels3,
                                    query_hidden_states=qh3,
                                    text_hidden_states=th3)
    total3 = jax.block_until_ready(total3)
    ref3 = jax.block_until_ready(_reference(pred3, labels3, qh3, th3, alphas))
    assert abs(float(total3) - float(ref3)) < 1e-3, (float(total3), float(ref3))
    assert set(to_log3.keys()) == {"mse", "softmax", "cosine"}

    print("KERNEL_OK")
</pallas_src>

<mosaic_0001>
module attributes {stable_mosaic.version = 11 : i64} {
  func.func @_partial_loss_kernel(%arg0: i32, %arg1: memref<8x16xf32, #tpu.memory_space<vmem>>, %arg2: memref<8x16xf32, #tpu.memory_space<vmem>>, %arg3: memref<8x32xf32, #tpu.memory_space<vmem>>, %arg4: memref<8x32xf32, #tpu.memory_space<vmem>>, %arg5: memref<1x8x128xf32, #tpu.memory_space<vmem>>) attributes {dimension_semantics = [#tpu.dimension_semantics<parallel>], iteration_bounds = array<i64: 1>, scalar_prefetch = 0 : i64, scratch_operands = 0 : i64, tpu.core_type = #tpu.core_type<tc>, window_params = [{transform_indices = @transform_0, window_bounds = array<i64: 8, 16>}, {transform_indices = @transform_1, window_bounds = array<i64: 8, 16>}, {transform_indices = @transform_2, window_bounds = array<i64: 8, 32>}, {transform_indices = @transform_3, window_bounds = array<i64: 8, 32>}, {transform_indices = @transform_4, window_bounds = array<i64: 1, 8, 128>}]} {
    %c0 = arith.constant 0 : index
    %c0_0 = arith.constant 0 : index
    %0 = vector.load %arg1[%c0, %c0_0] : memref<8x16xf32, #tpu.memory_space<vmem>>, vector<8x16xf32>
    %c0_1 = arith.constant 0 : index
    %c0_2 = arith.constant 0 : index
    %1 = vector.load %arg2[%c0_1, %c0_2] : memref<8x16xf32, #tpu.memory_space<vmem>>, vector<8x16xf32>
    %2 = arith.subf %0, %1 : vector<8x16xf32>
    %3 = arith.mulf %2, %2 : vector<8x16xf32>
    %4 = vector.shape_cast %3 : vector<8x16xf32> to vector<1x8x16xf32>
    %cst = arith.constant dense<0.000000e+00> : vector<1xf32>
    %5 = vector.multi_reduction <add>, %4, %cst [1, 2] : vector<1x8x16xf32> to vector<1xf32>
    %6 = vector.shape_cast %5 : vector<1xf32> to vector<1x1x1xf32>
    %7 = vector.extract %6[0, 0, 0] : f32 from vector<1x1x1xf32>
    %cst_3 = arith.constant dense<0xFF800000> : vector<8xf32>
    %8 = vector.multi_reduction <maximumf>, %0, %cst_3 [1] : vector<8x16xf32> to vector<8xf32>
    %9 = vector.shape_cast %8 : vector<8xf32> to vector<8x1xf32>
    %10 = vector.broadcast %9 : vector<8x1xf32> to vector<8x16xf32>
    %11 = arith.subf %0, %10 : vector<8x16xf32>
    %12 = math.exp %11 : vector<8x16xf32>
    %cst_4 = arith.constant dense<0.000000e+00> : vector<8xf32>
    %13 = vector.multi_reduction <add>, %12, %cst_4 [1] : vector<8x16xf32> to vector<8xf32>
    %14 = vector.shape_cast %13 : vector<8xf32> to vector<8x1xf32>
    %15 = math.log %14 : vector<8x1xf32>
    %16 = arith.addf %15, %9 : vector<8x1xf32>
    %17 = vector.extract_strided_slice %0 {offsets = [0, 0], sizes = [8, 1], strides = [1, 1]} : vector<8x16xf32> to vector<8x1xf32>
    %18 = arith.subf %16, %17 : vector<8x1xf32>
    %19 = vector.shape_cast %18 : vector<8x1xf32> to vector<1x8x1xf32>
    %cst_5 = arith.constant dense<0.000000e+00> : vector<1xf32>
    %20 = vector.multi_reduction <add>, %19, %cst_5 [1, 2] : vector<1x8x1xf32> to vector<1xf32>
    %21 = vector.shape_cast %20 : vector<1xf32> to vector<1x1x1xf32>
    %22 = vector.extract %21[0, 0, 0] : f32 from vector<1x1x1xf32>
    %c0_6 = arith.constant 0 : index
    %c0_7 = arith.constant 0 : index
    %23 = vector.load %arg3[%c0_6, %c0_7] : memref<8x32xf32, #tpu.memory_space<vmem>>, vector<8x32xf32>
    %c0_8 = arith.constant 0 : index
    %c0_9 = arith.constant 0 : index
    %24 = vector.load %arg4[%c0_8, %c0_9] : memref<8x32xf32, #tpu.memory_space<vmem>>, vector<8x32xf32>
    %25 = arith.mulf %23, %23 : vector<8x32xf32>
    %cst_10 = arith.constant dense<0.000000e+00> : vector<8xf32>
    %26 = vector.multi_reduction <add>, %25, %cst_10 [1] : vector<8x32xf32> to vector<8xf32>
    %27 = vector.shape_cast %26 : vector<8xf32> to vector<8x1xf32>
    %cst_11 = arith.constant 9.99999996E-13 : f32
    %28 = vector.broadcast %cst_11 : f32 to vector<8x1xf32>
    %29 = arith.addf %27, %28 : vector<8x1xf32>
    %30 = math.rsqrt %29 : vector<8x1xf32>
    %31 = arith.mulf %24, %24 : vector<8x32xf32>
    %cst_12 = arith.constant dense<0.000000e+00> : vector<8xf32>
    %32 = vector.multi_reduction <add>, %31, %cst_12 [1] : vector<8x32xf32> to vector<8xf32>
    %33 = vector.shape_cast %32 : vector<8xf32> to vector<8x1xf32>
    %cst_13 = arith.constant 9.99999996E-13 : f32
    %34 = vector.broadcast %cst_13 : f32 to vector<8x1xf32>
    %35 = arith.addf %33, %34 : vector<8x1xf32>
    %36 = math.rsqrt %35 : vector<8x1xf32>
    %37 = vector.broadcast %30 : vector<8x1xf32> to vector<8x32xf32>
    %38 = arith.mulf %23, %37 : vector<8x32xf32>
    %39 = vector.broadcast %36 : vector<8x1xf32> to vector<8x32xf32>
    %40 = arith.mulf %24, %39 : vector<8x32xf32>
    %41 = arith.mulf %38, %40 : vector<8x32xf32>
    %42 = vector.shape_cast %41 : vector<8x32xf32> to vector<1x8x32xf32>
    %cst_14 = arith.constant dense<0.000000e+00> : vector<1xf32>
    %43 = vector.multi_reduction <add>, %42, %cst_14 [1, 2] : vector<1x8x32xf32> to vector<1xf32>
    %44 = vector.shape_cast %43 : vector<1xf32> to vector<1x1x1xf32>
    %45 = vector.extract %44[0, 0, 0] : f32 from vector<1x1x1xf32>
    %46 = tpu.iota {dimensions = array<i32: 2>} : vector<1x8x128xi32>
    %47 = tpu.iota {dimensions = array<i32: 1>} : vector<1x8x128xi32>
    %c0_i32 = arith.constant 0 : i32
    %48 = vector.broadcast %c0_i32 : i32 to vector<1x8x128xi32>
    %49 = arith.cmpi eq, %47, %48 : vector<1x8x128xi32>
    %c0_i32_15 = arith.constant 0 : i32
    %50 = vector.broadcast %c0_i32_15 : i32 to vector<1x8x128xi32>
    %51 = arith.cmpi eq, %46, %50 : vector<1x8x128xi32>
    %52 = arith.andi %49, %51 : vector<1x8x128xi1>
    %cst_16 = arith.constant 0.000000e+00 : f32
    %53 = vector.broadcast %7 : f32 to vector<1x8x128xf32>
    %54 = vector.broadcast %cst_16 : f32 to vector<1x8x128xf32>
    %55 = arith.select %52, %53, %54 : vector<1x8x128xi1>, vector<1x8x128xf32>
    %c1_i32 = arith.constant 1 : i32
    %56 = vector.broadcast %c1_i32 : i32 to vector<1x8x128xi32>
    %57 = arith.cmpi eq, %46, %56 : vector<1x8x128xi32>
    %58 = arith.andi %49, %57 : vector<1x8x128xi1>
    %cst_17 = arith.constant 0.000000e+00 : f32
    %59 = vector.broadcast %22 : f32 to vector<1x8x128xf32>
    %60 = vector.broadcast %cst_17 : f32 to vector<1x8x128xf32>
    %61 = arith.select %58, %59, %60 : vector<1x8x128xi1>, vector<1x8x128xf32>
    %62 = arith.addf %55, %61 : vector<1x8x128xf32>
    %c2_i32 = arith.constant 2 : i32
    %63 = vector.broadcast %c2_i32 : i32 to vector<1x8x128xi32>
    %64 = arith.cmpi eq, %46, %63 : vector<1x8x128xi32>
    %65 = arith.andi %49, %64 : vector<1x8x128xi1>
    %cst_18 = arith.constant 0.000000e+00 : f32
    %66 = vector.broadcast %45 : f32 to vector<1x8x128xf32>
    %67 = vector.broadcast %cst_18 : f32 to vector<1x8x128xf32>
    %68 = arith.select %65, %66, %67 : vector<1x8x128xi1>, vector<1x8x128xf32>
    %69 = arith.addf %62, %68 : vector<1x8x128xf32>
    %c0_19 = arith.constant 0 : index
    %c0_20 = arith.constant 0 : index
    %c0_21 = arith.constant 0 : index
    %70 = vector.load %arg5[%c0_19, %c0_20, %c0_21] : memref<1x8x128xf32, #tpu.memory_space<vmem>>, vector<1x8x128xf32>
    tpu.vector_store %arg5[%c0_19, %c0_20, %c0_21], %69 {strides = array<i32>} : memref<1x8x128xf32, #tpu.memory_space<vmem>>, vector<1x8x128xf32>,
    return
  }
  func.func @transform_0(%arg0: i32) -> (i32, i32) {
    %c0_i32 = arith.constant 0 : i32
    %c0_i32_0 = arith.constant 0 : i32
    return %arg0, %c0_i32 : i32, i32
  }
  func.func @transform_1(%arg0: i32) -> (i32, i32) {
    %c0_i32 = arith.constant 0 : i32
    %c0_i32_0 = arith.constant 0 : i32
    return %arg0, %c0_i32 : i32, i32
  }
  func.func @transform_2(%arg0: i32) -> (i32, i32) {
    %c0_i32 = arith.constant 0 : i32
    %c0_i32_0 = arith.constant 0 : i32
    return %arg0, %c0_i32 : i32, i32
  }
  func.func @transform_3(%arg0: i32) -> (i32, i32) {
    %c0_i32 = arith.constant 0 : i32
    %c0_i32_0 = arith.constant 0 : i32
    return %arg0, %c0_i32 : i32, i32
  }
  func.func @transform_4(%arg0: i32) -> (i32, i32, i32) {
    %c0_i32 = arith.constant 0 : i32
    %c0_i32_0 = arith.constant 0 : i32
    %c0_i32_1 = arith.constant 0 : i32
    return %arg0, %c0_i32, %c0_i32_0 : i32, i32, i32
  }
}

</mosaic_0001>

<llo_original>
// kernel: _compound_forward.1
$region0: #{_compound_forward.1}
  #allocation0 [shape = 'u32[]', space=smem, size = 0x4, offset = 0x4, fixed_abs, tag = 'smem constant byte address 0x4 - core index']
  #allocation1 [shape = 'u32[144,128]{1,0:T(1,128)}', space=vmem, size = 0x12000, scoped, tag = 'internal scratch']
  %s0 = inlined_call_operand.hbm [shape: f32[8,16], index: 0, kind: input, shape index: {}]
  %s1 = inlined_call_operand.hbm [shape: f32[8,16], index: 1, kind: input, shape index: {}]
  %s2 = inlined_call_operand.hbm [shape: f32[8,32], index: 2, kind: input, shape index: {}]
  %s3 = inlined_call_operand.vmem [shape: f32[8,32], index: 3, kind: input, shape index: {}]
  %s4 = inlined_call_operand.vmem [shape: f32[1,8,128], index: 4, kind: output, shape index: {}]
  %s5 = sld [smem:[#allocation0]]
  $region38: #{_compound_forward.1} parent=0
    _
  %s7 = ssub.s32 1, %s5
  %s8 = scalar_select 0, %s7, %s5
  $region1: #{_compound_forward.1} parent=0
    #allocation2 [shape = 'u8[4096]{0}', space=vmem, size = 0x1000, scoped, tag = 'input window, operand 0, single buffered']
    #allocation3 [shape = 's32[1]{0}', space=sflag, size = 0x4, scoped, tag = 'scoped memory for _compound_forward.1']
    #allocation4 [shape = 'u8[4096]{0}', space=vmem, size = 0x1000, scoped, tag = 'input window, operand 1, single buffered']
    #allocation5 [shape = 's32[1]{0}', space=sflag, size = 0x4, scoped, tag = 'scoped memory for _compound_forward.1']
    #allocation6 [shape = 'u8[4096]{0}', space=vmem, size = 0x1000, scoped, tag = 'input window, operand 2, single buffered']
    %9 = vsyncpa [#allocation3], 0
    %10 = vsyncpa [#allocation5], 0
    // Predicated region
    $region2: #{_compound_forward.1} parent=1 // pred_check
      _
    $region3: #{_compound_forward.1} parent=1 // pred_check_branch
      %12 = sbr.rel (0) target = $region5
    $region4: #{_compound_forward.1} parent=1 // pred_region
      %s14 = ssub.s32 128, 128
      %15 = vsyncadd [#allocation3], %s14
      %s17 = sshll.u32 [#allocation2], 4
      %s18 = int_to_ptr.vmem [resolvable:$true] %s17
      %20 = dma.hbm_to_vmem [thread:$0]  %s0, 128, %s18, [#allocation3]
    $region5: #{_compound_forward.1} parent=1 // pred_fallthru
      _
    // Predicated region
    $region6: #{_compound_forward.1} parent=1 // pred_check
      _
    $region7: #{_compound_forward.1} parent=1 // pred_check_branch
      %22 = sbr.rel (0) target = $region9
    $region8: #{_compound_forward.1} parent=1 // pred_region
      %s24 = ssub.s32 128, 128
      %25 = vsyncadd [#allocation5], %s24
      %s27 = sshll.u32 [#allocation4], 4
      %s28 = int_to_ptr.vmem [resolvable:$true] %s27
      %30 = dma.hbm_to_vmem [thread:$0]  %s1, 128, %s28, [#allocation5]
    $region9: #{_compound_forward.1} parent=1 // pred_fallthru
      _
    // Predicated region
    $region10: #{_compound_forward.1} parent=1 // pred_check
      _
    $region11: #{_compound_forward.1} parent=1 // pred_check_branch
      %32 = sbr.rel (0) target = $region13
    $region12: #{_compound_forward.1} parent=1 // pred_region
      %s34 = ssub.s32 128, 128
      %35 = vsyncadd [#allocation5], %s34
      %s37 = sshll.u32 [#allocation6], 4
      %s38 = int_to_ptr.vmem [resolvable:$true] %s37
      %40 = dma.hbm_to_vmem [thread:$0]  %s2, 128, %s38, [#allocation5]
    $region13: #{_compound_forward.1} parent=1 // pred_fallthru
      _
    // Predicated region
    $region14: #{_compound_forward.1} parent=1 // pred_check
      _
    $region15: #{_compound_forward.1} parent=1 // pred_check_branch
      %42 = sbr.rel (0) target = $region17
    $region16: #{_compound_forward.1} parent=1 // pred_region
      _
    $region17: #{_compound_forward.1} parent=1 // pred_fallthru
      _
    // Predicated region
    $region18: #{_compound_forward.1} parent=1 // pred_check
      _
    $region19: #{_compound_forward.1} parent=1 // pred_check_branch
      %44 = sbr.rel (0) target = $region21
    $region20: #{_compound_forward.1} parent=1 // pred_region
      %45 = dma.done [#allocation3], 128
    $region21: #{_compound_forward.1} parent=1 // pred_fallthru
      _
    // Predicated region
    $region22: #{_compound_forward.1} parent=1 // pred_check
      _
    $region23: #{_compound_forward.1} parent=1 // pred_check_branch
      %47 = sbr.rel (0) target = $region25
    $region24: #{_compound_forward.1} parent=1 // pred_region
      %48 = dma.done [#allocation5], 128
    $region25: #{_compound_forward.1} parent=1 // pred_fallthru
      _
    // Predicated region
    $region26: #{_compound_forward.1} parent=1 // pred_check
      _
    $region27: #{_compound_forward.1} parent=1 // pred_check_branch
      %50 = sbr.rel (0) target = $region29
    $region28: #{_compound_forward.1} parent=1 // pred_region
      %51 = dma.done [#allocation5], 128
    $region29: #{_compound_forward.1} parent=1 // pred_fallthru
      _
    %v52 = vld [vmem:[#allocation2] sm:$0xff]
    %v53 = vld [vmem:[#allocation4] sm:$0xff]
    %v54 = vsub.f32 %v52, %v53
    %v55 = vmul.f32 %v54, %v54
    %vm56 = vcmask 130048
    %v57 = vsel %vm56, %v55, 0.0
    %58 = vadd.xlane.f32.xlu0 %v57
    %v59 = vpop.xlane.xlu0 %58
    %v60 = vrot.slane %v59, 4
    %v61 = vadd.f32 %v59, %v60
    %v62 = vrot.slane %v61, 2
    %v63 = vadd.f32 %v61, %v62
    %v64 = vrot.slane %v63, 1
    %v65 = vadd.f32 %v63, %v64
    %s66 = vtos %v65
    %v67 = vsel %vm56, %v52, -inf
    %68 = vmax.xlane.f32.xlu0 %v67
    %v69 = vpop.xlane.xlu0 %68
    %v70 = vsub.f32 %v52, %v69
    %v71 = vmul.f32 %v70, 1.442695
    %v72 = vpow.pop %v71
    %v73 = vsel %vm56, %v72, 0.0
    %74 = vadd.xlane.f32.xlu0 %v73
    %v75 = vpop.xlane.xlu0 %74
    %v76 = vlog2.pop %v75
    %v77 = vmul.f32 %v76, 0.6931472
    %v78 = vadd.f32 %v77, %v69
    %v79 = vsub.f32 %v78, %v52
    %vm80 = vcmask 7168
    %v81 = vsel %vm80, %v79, 0.0
    %82 = vadd.xlane.f32.xlu0 %v81
    %v83 = vpop.xlane.xlu0 %82
    %v84 = vrot.slane %v83, 4
    %v85 = vadd.f32 %v83, %v84
    %v86 = vrot.slane %v85, 2
    %v87 = vadd.f32 %v85, %v86
    %v88 = vrot.slane %v87, 1
    %v89 = vadd.f32 %v87, %v88
    %s90 = vtos %v89
    %v91 = vld [vmem:[#allocation6] sm:$0xff]
    %v92 = vld [vmem:[%s3] sm:$0xff]
    %v93 = vmul.f32 %v91, %v91
    %vm94 = vcmask 261120
    %v95 = vsel %vm94, %v93, 0.0
    %96 = vadd.xlane.f32.xlu0 %v95
    %v97 = vpop.xlane.xlu0 %96
    %v98 = vadd.f32 %v97, 1e-12
    %v99 = vrsqrt.pop %v98
    %v100 = vmul.f32 %v92, %v92
    %v101 = vsel %vm94, %v100, 0.0
    %102 = vadd.xlane.f32.xlu0 %v101
    %v103 = vpop.xlane.xlu0 %102
    %v104 = vadd.f32 %v103, 1e-12
    %v105 = vrsqrt.pop %v104
    %v106 = vmul.f32 %v91, %v99
    %v107 = vmul.f32 %v92, %v105
    %v108 = vmul.f32 %v106, %v107
    %v109 = vsel %vm94, %v108, 0.0
    %110 = vadd.xlane.f32.xlu0 %v109
    %v111 = vpop.xlane.xlu0 %110
    %v112 = vrot.slane %v111, 4
    %v113 = vadd.f32 %v111, %v112
    %v114 = vrot.slane %v113, 2
    %v115 = vadd.f32 %v113, %v114
    %v116 = vrot.slane %v115, 1
    %v117 = vadd.f32 %v115, %v116
    %s118 = vtos %v117
    %v119 = vlaneseq
    %v120 = vand.u32 %v119, 127
    %v121 = vlaneseq
    %v122 = vshrl.u32 %v121, 7
    %vm123 = vcmp.eq.s32.totalorder %v122, 0
    %vm124 = vcmp.eq.s32.totalorder %v120, 0
    %vm125 = vmand %vm123, %vm124
    %v126 = vstv %s66
    %v127 = vsel %vm125, %v126, 0.0
    %vm128 = vcmp.eq.s32.totalorder %v120, 1
    %vm129 = vmand %vm123, %vm128
    %v130 = vstv %s90
    %v131 = vsel %vm129, %v130, 0.0
    %v132 = vadd.f32 %v127, %v131
    %vm133 = vcmp.eq.s32.totalorder %v120, 2
    %vm134 = vmand %vm123, %vm133
    %v135 = vstv %s118
    %v136 = vsel %vm134, %v135, 0.0
    %v137 = vadd.f32 %v132, %v136
    %138 = vst [vmem:[%s4] sm:$0xff] %v137
    // Predicated region
    $region30: #{_compound_forward.1} parent=1 // pred_check
      _
    $region31: #{_compound_forward.1} parent=1 // pred_check_branch
      %140 = sbr.rel (0) target = $region33
    $region32: #{_compound_forward.1} parent=1 // pred_region
      _
    $region33: #{_compound_forward.1} parent=1 // pred_fallthru
      _
    // Predicated region
    $region34: #{_compound_forward.1} parent=1 // pred_check
      _
    $region35: #{_compound_forward.1} parent=1 // pred_check_branch
      %142 = sbr.rel (0) target = $region37
    $region36: #{_compound_forward.1} parent=1 // pred_region
      _
    $region37: #{_compound_forward.1} parent=1 // pred_fallthru
      _
    %143 = vsyncpa [#allocation3], 1
    %144 = vsyncpa [#allocation5], 1

</llo_original>
